<compile_context>
chip_gen: v7x
topology: tpu7x:2x2x1
jax: 0.10.0
libtpu: 0.0.40
codegen_flags: <defaults>
</compile_context>

<pallas_src>
import functools

import jax
import jax.numpy as jnp
from jax.experimental import pallas as pl
from jax.experimental.pallas import tpu as pltpu


def _mse_masked_kernel(len_ref, x_ref, y_ref, o_ref, *, feat_dim, elems_per_batch):
    """One (block_rows, C) tile of one batch's flattened (T*D,) element stream."""
    b = pl.program_id(0)          # batch index (parallel axis)
    s = pl.program_id(1)          # reduction step along this batch's stream

    # Zero this batch's resident accumulator at the start of the reduction axis.
    @pl.when(s == 0)
    def _():
        o_ref[...] = jnp.zeros_like(o_ref)

    rows, lanes = x_ref.shape

    diff = x_ref[...].astype(jnp.float32) - y_ref[...].astype(jnp.float32)
    sq = diff * diff

    # Flat element offset within this batch's (T*D,) stream.
    row = jax.lax.broadcasted_iota(jnp.int32, (rows, lanes), 0)
    col = jax.lax.broadcasted_iota(jnp.int32, (rows, lanes), 1)
    flat = (s * rows + row) * lanes + col

    # Element valid  <=>  its timestep t = flat // D  <  length[b]
    #                <=>  flat < length[b] * D.
    # This also excludes garbage rows of a ragged boundary block (flat >= T*D),
    # and jnp.where (not multiply-by-zero) keeps any NaN/Inf garbage out.
    limit = jnp.minimum(len_ref[b] * feat_dim, elems_per_batch)
    masked = jnp.where(flat < limit, sq, 0.0)

    # Sublane-only partial reduction per step (mostly VPU adds); the cheap
    # final lane reduction over the tiny (B, 1, C) output happens in the wrapper.
    o_ref[...] += jnp.sum(masked, axis=0, keepdims=True)


def mse_loss_masked(inp, target, length, *, target_block_bytes=2 * 1024 * 1024):
    """inp, target: (B, T, D) float; length: (B,) int. Returns scalar f32 loss."""
    B, T, D = inp.shape
    TD = T * D
    itemsize = inp.dtype.itemsize

    # Lane-dense per-batch view when possible (free reshape of contiguous data);
    # otherwise keep the (B, T, D) layout (last dim = D, full-dim block).
    C = 128 if TD % 128 == 0 else D
    R = TD // C
    x = inp.reshape(B, R, C)
    y = target.reshape(B, R, C)

    # Rows per grid step: sized by bytes to amortize per-step overhead,
    # multiple of 8 sublanes (or the full extent R). No padding: a ragged last
    # block is masked in-kernel.
    rows_target = max(8, (target_block_bytes // (C * itemsize)) // 8 * 8)
    if R <= rows_target:
        block_rows, steps = R, 1
    else:
        block_rows, steps = rows_target, -(-R // rows_target)

    kernel = functools.partial(_mse_masked_kernel, feat_dim=D, elems_per_batch=TD)

    row_map = lambda b, s, lens: (b, s, 0)
    acc_map = lambda b, s, lens: (b, 0, 0)

    partials = pl.pallas_call(
        kernel,
        out_shape=jax.ShapeDtypeStruct((B, 1, C), jnp.float32),
        grid_spec=pltpu.PrefetchScalarGridSpec(
            num_scalar_prefetch=1,              # `length` -> SMEM
            grid=(B, steps),
            in_specs=[
                pl.BlockSpec((None, block_rows, C), row_map),   # input rows
                pl.BlockSpec((None, block_rows, C), row_map),   # target rows
            ],
            out_specs=pl.BlockSpec((None, 1, C), acc_map),      # resident accumulator
        ),
        compiler_params=pltpu.CompilerParams(
            dimension_semantics=("parallel", "arbitrary"),
            vmem_limit_bytes=32 * 1024 * 1024,   # ~8 MiB actually used; safe on v5e/v6e/v7x
        ),
        cost_estimate=pl.CostEstimate(
            flops=3 * B * TD,
            transcendentals=0,
            bytes_accessed=2 * B * TD * itemsize + B * C * 4,
        ),
    )(length.astype(jnp.int32), x, y)

    masked_sum = partials.sum()
    denom = length.astype(jnp.float32).sum() * jnp.float32(D)
    # TODO(synk): denom is 0 (-> NaN) if all lengths are 0, matching the reference module.
    return masked_sum / denom


def mse_loss_masked_ref(inp, target, length):
    B, T, D = inp.shape
    mask = (jnp.arange(T)[None, :] < length[:, None]).astype(jnp.float32)[..., None]
    diff = inp.astype(jnp.float32) - target.astype(jnp.float32)
    losses = diff * diff * mask
    return losses.sum() / (length.astype(jnp.float32).sum() * D)


if __name__ == "__main__":
    key = jax.random.PRNGKey(0)

    # Test 1: basic small shapes (single step, lane-dense path).
    k1, k2, k3, k4, k5, k6 = jax.random.split(key, 6)
    batch, max_len, dim = 2, 8, 32
    inp = jax.random.normal(k1, (batch, max_len, dim), dtype=jnp.float32)
    tgt = jax.random.normal(k2, (batch, max_len, dim), dtype=jnp.float32)
    length = jnp.array([5, 8], dtype=jnp.int32)
    loss = jax.block_until_ready(jax.jit(mse_loss_masked)(inp, tgt, length))
    ref = mse_loss_masked_ref(inp, tgt, length)
    assert loss.shape == ()
    assert jnp.allclose(loss, ref, atol=1e-5, rtol=1e-4), (loss, ref)

    # Test 2: multi-step reduction + ragged boundary block + a zero-length batch
    # (tiny target_block_bytes forces several grid steps at small shapes).
    inp2 = jax.random.normal(k3, (3, 72, 32), dtype=jnp.float32)
    tgt2 = jax.random.normal(k4, (3, 72, 32), dtype=jnp.float32)
    len2 = jnp.array([0, 40, 72], dtype=jnp.int32)
    f2 = jax.jit(lambda a, b, l: mse_loss_masked(a, b, l, target_block_bytes=8192))
    loss2 = jax.block_until_ready(f2(inp2, tgt2, len2))
    ref2 = mse_loss_masked_ref(inp2, tgt2, len2)
    assert jnp.allclose(loss2, ref2, atol=1e-5, rtol=1e-4), (loss2, ref2)

    # Test 3: bf16 inputs, T*D not a multiple of 128 (fallback (T, D) layout).
    inp3 = jax.random.normal(k5, (2, 6, 80), dtype=jnp.bfloat16)
    tgt3 = jax.random.normal(k6, (2, 6, 80), dtype=jnp.bfloat16)
    len3 = jnp.array([3, 6], dtype=jnp.int32)
    loss3 = jax.block_until_ready(jax.jit(mse_loss_masked)(inp3, tgt3, len3))
    ref3 = mse_loss_masked_ref(inp3, tgt3, len3)
    assert jnp.allclose(loss3, ref3, atol=1e-3, rtol=2e-2), (loss3, ref3)

    print("KERNEL_OK")
</pallas_src>

<mosaic_0001>
module attributes {stable_mosaic.version = 11 : i64} {
  func.func @_mse_masked_kernel(%arg0: i32, %arg1: i32, %arg2: memref<2xi32, #tpu.memory_space<smem>>, %arg3: memref<1x2x128xf32, #tpu.memory_space<vmem>>, %arg4: memref<1x2x128xf32, #tpu.memory_space<vmem>>, %arg5: memref<1x1x128xf32, #tpu.memory_space<vmem>>) attributes {dimension_semantics = [#tpu.dimension_semantics<parallel>, #tpu.dimension_semantics<arbitrary>], iteration_bounds = array<i64: 2, 1>, scalar_prefetch = 1 : i64, scratch_operands = 0 : i64, tpu.core_type = #tpu.core_type<tc>, window_params = [{transform_indices = @transform_0, window_bounds = array<i64: 1, 2, 128>}, {transform_indices = @transform_1, window_bounds = array<i64: 1, 2, 128>}, {transform_indices = @transform_2, window_bounds = array<i64: 1, 1, 128>}]} {
    %c0_i32 = arith.constant 0 : i32
    %0 = arith.cmpi eq, %arg1, %c0_i32 : i32
    %1 = arith.extui %0 : i1 to i32
    %c0_i32_0 = arith.constant 0 : i32
    %2 = arith.cmpi ne, %1, %c0_i32_0 : i32
    scf.if %2 {
      %cst_13 = arith.constant 0.000000e+00 : f32
      %33 = vector.broadcast %cst_13 : f32 to vector<1x128xf32>
      %c0_14 = arith.constant 0 : index
      %c0_15 = arith.constant 0 : index
      %c0_16 = arith.constant 0 : index
      %34 = vector.load %arg5[%c0_14, %c0_15, %c0_16] : memref<1x1x128xf32, #tpu.memory_space<vmem>>, vector<1x1x128xf32>
      %35 = vector.shape_cast %34 : vector<1x1x128xf32> to vector<1x128xf32>
      %36 = vector.shape_cast %33 : vector<1x128xf32> to vector<1x1x128xf32>
      tpu.vector_store %arg5[%c0_14, %c0_15, %c0_16], %36 {strides = array<i32>} : memref<1x1x128xf32, #tpu.memory_space<vmem>>, vector<1x1x128xf32>,
    } else {
    }
    %c0 = arith.constant 0 : index
    %c0_1 = arith.constant 0 : index
    %c0_2 = arith.constant 0 : index
    %3 = vector.load %arg3[%c0, %c0_1, %c0_2] : memref<1x2x128xf32, #tpu.memory_space<vmem>>, vector<1x2x128xf32>
    %4 = vector.shape_cast %3 : vector<1x2x128xf32> to vector<2x128xf32>
    %c0_3 = arith.constant 0 : index
    %c0_4 = arith.constant 0 : index
    %c0_5 = arith.constant 0 : index
    %5 = vector.load %arg4[%c0_3, %c0_4, %c0_5] : memref<1x2x128xf32, #tpu.memory_space<vmem>>, vector<1x2x128xf32>
    %6 = vector.shape_cast %5 : vector<1x2x128xf32> to vector<2x128xf32>
    %7 = arith.subf %4, %6 : vector<2x128xf32>
    %8 = arith.mulf %7, %7 : vector<2x128xf32>
    %9 = tpu.iota {dimensions = array<i32: 0>} : vector<2x128xi32>
    %10 = tpu.iota {dimensions = array<i32: 1>} : vector<2x128xi32>
    %c2_i32 = arith.constant 2 : i32
    %11 = arith.muli %arg1, %c2_i32 : i32
    %12 = vector.broadcast %11 : i32 to vector<2x128xi32>
    %13 = arith.addi %12, %9 : vector<2x128xi32>
    %c128_i32 = arith.constant 128 : i32
    %14 = vector.broadcast %c128_i32 : i32 to vector<2x128xi32>
    %15 = arith.muli %13, %14 : vector<2x128xi32>
    %16 = arith.addi %15, %10 : vector<2x128xi32>
    %17 = arith.index_cast %arg0 : i32 to index
    %18 = memref.load %arg2[%17] : memref<2xi32, #tpu.memory_space<smem>>
    %c32_i32 = arith.constant 32 : i32
    %19 = arith.muli %18, %c32_i32 : i32
    %c256_i32 = arith.constant 256 : i32
    %20 = arith.minsi %19, %c256_i32 : i32
    %21 = vector.broadcast %20 : i32 to vector<2x128xi32>
    %22 = arith.cmpi slt, %16, %21 : vector<2x128xi32>
    %cst = arith.constant 0.000000e+00 : f32
    %23 = vector.broadcast %cst : f32 to vector<2x128xf32>
    %24 = arith.select %22, %8, %23 : vector<2x128xi1>, vector<2x128xf32>
    %c0_6 = arith.constant 0 : index
    %c0_7 = arith.constant 0 : index
    %c0_8 = arith.constant 0 : index
    %25 = vector.load %arg5[%c0_6, %c0_7, %c0_8] : memref<1x1x128xf32, #tpu.memory_space<vmem>>, vector<1x1x128xf32>
    %26 = vector.shape_cast %25 : vector<1x1x128xf32> to vector<1x128xf32>
    %cst_9 = arith.constant dense<0.000000e+00> : vector<128xf32>
    %27 = vector.multi_reduction <add>, %24, %cst_9 [0] : vector<2x128xf32> to vector<128xf32>
    %28 = vector.shape_cast %27 : vector<128xf32> to vector<1x128xf32>
    %29 = arith.addf %26, %28 : vector<1x128xf32>
    %c0_10 = arith.constant 0 : index
    %c0_11 = arith.constant 0 : index
    %c0_12 = arith.constant 0 : index
    %30 = vector.load %arg5[%c0_10, %c0_11, %c0_12] : memref<1x1x128xf32, #tpu.memory_space<vmem>>, vector<1x1x128xf32>
    %31 = vector.shape_cast %30 : vector<1x1x128xf32> to vector<1x128xf32>
    %32 = vector.shape_cast %29 : vector<1x128xf32> to vector<1x1x128xf32>
    tpu.vector_store %arg5[%c0_10, %c0_11, %c0_12], %32 {strides = array<i32>} : memref<1x1x128xf32, #tpu.memory_space<vmem>>, vector<1x1x128xf32>,
    return
  }
  func.func @transform_0(%arg0: i32, %arg1: i32, %arg2: memref<2xi32, #tpu.memory_space<smem>>) -> (i32, i32, i32) {
    %c0_i32 = arith.constant 0 : i32
    %c0_i32_0 = arith.constant 0 : i32
    return %arg0, %arg1, %c0_i32 : i32, i32, i32
  }
  func.func @transform_1(%arg0: i32, %arg1: i32, %arg2: memref<2xi32, #tpu.memory_space<smem>>) -> (i32, i32, i32) {
    %c0_i32 = arith.constant 0 : i32
    %c0_i32_0 = arith.constant 0 : i32
    return %arg0, %arg1, %c0_i32 : i32, i32, i32
  }
  func.func @transform_2(%arg0: i32, %arg1: i32, %arg2: memref<2xi32, #tpu.memory_space<smem>>) -> (i32, i32, i32) {
    %c0_i32 = arith.constant 0 : i32
    %c0_i32_0 = arith.constant 0 : i32
    %c0_i32_1 = arith.constant 0 : i32
    return %arg0, %c0_i32, %c0_i32_0 : i32, i32, i32
  }
}

</mosaic_0001>

<llo_original>
// kernel: mse_loss_masked.1
$region0: #{mse_loss_masked.1}
  #allocation0 [shape = 'u32[]', space=smem, size = 0x4, offset = 0x4, fixed_abs, tag = 'smem constant byte address 0x4 - core index']
  #allocation1 [shape = 'u32[144,128]{1,0:T(1,128)}', space=vmem, size = 0x12000, scoped, tag = 'internal scratch']
  #allocation2 [shape = 's32[1]{0}', space=sflag, size = 0x4, scoped, tag = 'scoped memory for mse_loss_masked.1']
  #allocation3 [shape = 'u8[512]{0}', space=smem, size = 0x200, scoped, tag = 'prefetched SMEM operand 0']
  %s0 = inlined_call_operand.vmem [shape: s32[2], index: 0, kind: input, shape index: {}]
  %s1 = inlined_call_operand.vmem [shape: f32[2,2,128], index: 1, kind: input, shape index: {}]
  %s2 = inlined_call_operand.vmem [shape: f32[2,2,128], index: 2, kind: input, shape index: {}]
  %s3 = inlined_call_operand.vmem [shape: f32[2,1,128], index: 3, kind: output, shape index: {}]
  %s4 = sld [smem:[#allocation0]]
  $region45: #{mse_loss_masked.1} parent=0
    _
  %s6 = ssub.s32 1, %s4
  %s7 = scalar_select 0, %s6, %s4
  %s8 = sshll.u32 %s0, 4
  %s9 = int_to_ptr.vmem [resolvable:$true] %s8
  %11 = dma.vmem_to_smem %s9, 16, [#allocation3], [#allocation2]
  %12 = dma.done [#allocation2], 16
  %13 = sfence
  loop: start=0, step=1, limit=4
  $region2: #{mse_loss_masked.1} parent=0 // loop_pre_header
    _
  $region3: #{mse_loss_masked.1} parent=0 // loop_header
    %s15 = sphi 0, %s19
    %p16 = scmp.ge.s32.totalorder %s15, 4
    %s22 = sphi 0, %s34
    %s23 = sphi 0, %s30
    %s24 = sphi 0, %s22
    %s25 = sphi 0, %s23
    %s26 = sphi 0, %s24
    %s27 = sphi 0, %s25
    %s39 = sphi 0, %s41
    %s42 = sphi 0, %s39
    %s43 = sphi 0, %s42
    %s59 = sphi 0, %s43
    %s67 = sphi 0, %s69
    %s70 = sphi 0, %s67
    %s71 = sphi 0, %s70
    %s87 = sphi 0, %s71
    %s93 = sphi 0, %s95
    %s96 = sphi 0, %s93
    %s97 = sphi 0, %s96
    %s113 = sphi 0, %s97
  $region4: #{mse_loss_masked.1} parent=0 // loop_header_branch
    %18 = sbr.rel (%p16) target = $region8
  $region5: #{mse_loss_masked.1} parent=0 // loop_body
    %s20 = ssub.s32 %s15, 1
    %s21 = ssub.s32 %s15, 2
    %s28 = sadd.s32 1, %s23
    %p29 = scmp.ge.s32.totalorder %s28, 1
    %s30 = scalar_select %p29, 0, %s28
    %s31 = sadd.s32 1, %s22
    %s32 = scalar_select %p29, %s31, %s22
    %p33 = scmp.ge.s32.totalorder %s32, 2
    %s34 = scalar_select %p33, 0, %s32
    %s35 = ssub.s32 %s22, %s34
    %s36 = ssub.s32 %s23, %s30
    %s37 = sor.u32 %s35, %s36
    %p38 = scmp.eq.s32.totalorder %s37, 0
    %s40 = sadd.s32 %s39, 1
    %s41 = scalar_select %p38, %s39, %s40
    %p44 = pneg %p38
    %p45 = scmp.eq.s32.totalorder %s15, 1
    %p46 = por %p44, %p45
    %p47 = scmp.ne.s32.totalorder %s39, %s42
    %p48 = scmp.eq.s32.totalorder %s15, 0
    %p49 = por %p47, %p48
    %p50 = scmp.ne.s32.totalorder %s39, %s42
    %p51 = scmp.eq.s32.totalorder %s20, 1
    %p52 = por %p50, %p51
    %p53 = scmp.ne.s32.totalorder %s42, %s43
    %p54 = scmp.eq.s32.totalorder %s20, 0
    %p55 = por %p53, %p54
    %p56 = scmp.ne.s32.totalorder %s42, %s43
    %p57 = scmp.eq.s32.totalorder %s21, 1
    %p58 = por %p56, %p57
    %p60 = scmp.ne.s32.totalorder %s43, %s59
    %p61 = scmp.eq.s32.totalorder %s21, 0
    %p62 = por %p60, %p61
    %s63 = ssub.s32 %s22, %s34
    %s64 = ssub.s32 %s23, %s30
    %s65 = sor.u32 %s63, %s64
    %p66 = scmp.eq.s32.totalorder %s65, 0
    %s68 = sadd.s32 %s67, 1
    %s69 = scalar_select %p66, %s67, %s68
    %p72 = pneg %p66
    %p73 = scmp.eq.s32.totalorder %s15, 1
    %p74 = por %p72, %p73
    %p75 = scmp.ne.s32.totalorder %s67, %s70
    %p76 = scmp.eq.s32.totalorder %s15, 0
    %p77 = por %p75, %p76
    %p78 = scmp.ne.s32.totalorder %s67, %s70
    %p79 = scmp.eq.s32.totalorder %s20, 1
    %p80 = por %p78, %p79
    %p81 = scmp.ne.s32.totalorder %s70, %s71
    %p82 = scmp.eq.s32.totalorder %s20, 0
    %p83 = por %p81, %p82
    %p84 = scmp.ne.s32.totalorder %s70, %s71
    %p85 = scmp.eq.s32.totalorder %s21, 1
    %p86 = por %p84, %p85
    %p88 = scmp.ne.s32.totalorder %s71, %s87
    %p89 = scmp.eq.s32.totalorder %s21, 0
    %p90 = por %p88, %p89
    %s91 = ssub.s32 %s22, %s34
    %p92 = scmp.eq.s32.totalorder %s91, 0
    %s94 = sadd.s32 %s93, 1
    %s95 = scalar_select %p92, %s93, %s94
    %p98 = pneg %p92
    %p99 = scmp.eq.s32.totalorder %s15, 1
    %p100 = por %p98, %p99
    %p101 = scmp.ne.s32.totalorder %s93, %s96
    %p102 = scmp.eq.s32.totalorder %s15, 0
    %p103 = por %p101, %p102
    %p104 = scmp.ne.s32.totalorder %s93, %s96
    %p105 = scmp.eq.s32.totalorder %s20, 1
    %p106 = por %p104, %p105
    %p107 = scmp.ne.s32.totalorder %s96, %s97
    %p108 = scmp.eq.s32.totalorder %s20, 0
    %p109 = por %p107, %p108
    %p110 = scmp.ne.s32.totalorder %s96, %s97
    %p111 = scmp.eq.s32.totalorder %s21, 1
    %p112 = por %p110, %p111
    %p114 = scmp.ne.s32.totalorder %s97, %s113
    %p115 = scmp.eq.s32.totalorder %s21, 0
    %p116 = por %p114, %p115
    %p117 = scmp.le.s32.totalorder 1, %s15
    %p118 = scmp.lt.s32.totalorder %s15, 3
    %p119 = pnand %p117, %p118
    %p120 = pneg %p119
    // Predicated region
    $region9: #{mse_loss_masked.1} parent=5 // pred_check
      _
    $region10: #{mse_loss_masked.1} parent=5 // pred_check_branch
      %122 = sbr.rel (%p119) target = $region12
    $region11: #{mse_loss_masked.1} parent=5 // pred_region
      %s123 = ssub.s32 %s15, 1
    $region12: #{mse_loss_masked.1} parent=5 // pred_fallthru
      _
    %p124 = scmp.lt.s32.totalorder %s15, 2
    // Predicated region
    $region13: #{mse_loss_masked.1} parent=5 // pred_check
      %p125 = pneg %p124
    $region14: #{mse_loss_masked.1} parent=5 // pred_check_branch
      %127 = sbr.rel (%p125) target = $region16
    $region15: #{mse_loss_masked.1} parent=5 // pred_region
      // Predicated region
      $region17: #{mse_loss_masked.1} parent=15 // pred_check
        %p128 = pneg %p49
      $region18: #{mse_loss_masked.1} parent=15 // pred_check_branch
        %130 = sbr.rel (%p128) target = $region20
      $region19: #{mse_loss_masked.1} parent=15 // pred_region
        %p131 = scmp.lt.s32.totalorder %s22, 1
        %s132 = scalar_select %p131, %s22, 1
        %p133 = scmp.lt.s32.totalorder %s23, 0
        %s134 = scalar_select %p133, %s23, 0
        %s135 = sadd.s32 %s134, %s132
        %s136 = smul.addr %s135, 2
        %s137 = scalar_lea.vmem %s1, %s136
      $region20: #{mse_loss_masked.1} parent=15 // pred_fallthru
        _
      // Predicated region
      $region21: #{mse_loss_masked.1} parent=15 // pred_check
        %p138 = pneg %p77
      $region22: #{mse_loss_masked.1} parent=15 // pred_check_branch
        %140 = sbr.rel (%p138) target = $region24
      $region23: #{mse_loss_masked.1} parent=15 // pred_region
        %p141 = scmp.lt.s32.totalorder %s22, 1
        %s142 = scalar_select %p141, %s22, 1
        %p143 = scmp.lt.s32.totalorder %s23, 0
        %s144 = scalar_select %p143, %s23, 0
        %s145 = sadd.s32 %s144, %s142
        %s146 = smul.addr %s145, 2
        %s147 = scalar_lea.vmem %s2, %s146
      $region24: #{mse_loss_masked.1} parent=15 // pred_fallthru
        _
    $region16: #{mse_loss_masked.1} parent=5 // pred_fallthru
      _
    %p148 = scmp.le.s32.totalorder 1, %s15
    %p149 = scmp.lt.s32.totalorder %s15, 3
    %p150 = pnand %p148, %p149
    %p151 = pneg %p150
    // Predicated region
    $region25: #{mse_loss_masked.1} parent=5 // pred_check
      _
    $region26: #{mse_loss_masked.1} parent=5 // pred_check_branch
      %153 = sbr.rel (%p150) target = $region28
    $region27: #{mse_loss_masked.1} parent=5 // pred_region
      %s154 = ssub.s32 %s15, 1
      %p155 = scmp.lt.s32.totalorder %s24, 1
      %s156 = scalar_select %p155, %s24, 1
      %p157 = scmp.lt.s32.totalorder %s25, 0
      %s158 = scalar_select %p157, %s25, 0
      %s159 = sadd.s32 %s158, %s156
      %s160 = smul.addr %s159, 2
      %s161 = scalar_lea.vmem %s1, %s160
      %p162 = pneg %p55
      %p163 = pneg %p52
      %p164 = scmp.lt.s32.totalorder %s24, 1
      %s165 = scalar_select %p164, %s24, 1
      %p166 = scmp.lt.s32.totalorder %s25, 0
      %s167 = scalar_select %p166, %s25, 0
      %s168 = sadd.s32 %s167, %s165
      %s169 = smul.addr %s168, 2
      %s170 = scalar_lea.vmem %s2, %s169
      %p171 = pneg %p83
      %p172 = pneg %p80
      %p173 = pneg %p109
      %p174 = pneg %p106
      %p175 = scmp.lt.s32.totalorder %s24, 1
      %s176 = scalar_select %p175, %s24, 1
      %s177 = scalar_lea.vmem %s3, %s176
      %p178 = scmp.lt.s32.totalorder %s24, 1
      %s179 = scalar_select %p178, %s24, 1
      %p180 = scmp.lt.s32.totalorder %s25, 0
      %s181 = scalar_select %p180, %s25, 0
      %s182 = sadd.s32 %s181, %s179
      %s183 = smul.addr %s182, 2
      %s184 = scalar_lea.vmem %s1, %s183
      %p185 = scmp.lt.s32.totalorder %s24, 1
      %s186 = scalar_select %p185, %s24, 1
      %p187 = scmp.lt.s32.totalorder %s25, 0
      %s188 = scalar_select %p187, %s25, 0
      %s189 = sadd.s32 %s188, %s186
      %s190 = smul.addr %s189, 2
      %s191 = scalar_lea.vmem %s2, %s190
      %p192 = scmp.lt.s32.totalorder %s24, 1
      %s193 = scalar_select %p192, %s24, 1
      %s194 = scalar_lea.vmem %s3, %s193
      %p195 = scmp.eq.s32.totalorder %s25, 0
      // Predicated region
      $region29: #{mse_loss_masked.1} parent=27 // pred_check
        %p196 = pneg %p195
      $region30: #{mse_loss_masked.1} parent=27 // pred_check_branch
        %198 = sbr.rel (%p196) target = $region32
      $region31: #{mse_loss_masked.1} parent=27 // pred_region
        %199 = vst [vmem:[%s194] sm:$0x1] 0.0
      $region32: #{mse_loss_masked.1} parent=27 // pred_fallthru
        _
      %v200 = vld [vmem:[%s184] sm:$0x3]
      %v201 = vld [vmem:[%s191] sm:$0x3]
      %v202 = vsub.f32 %v200, %v201
      %v203 = vmul.f32 %v202, %v202
      %v204 = vlaneseq
      %v205 = vshrl.u32 %v204, 7
      %v206 = vlaneseq
      %v207 = vand.u32 %v206, 127
      %s208 = smul.u32 %s25, 2
      %v209 = vstv %s208
      %v210 = vadd.s32 %v209, %v205
      %v211 = vmul.u32 %v210, 128
      %v212 = vadd.s32 %v211, %v207
      %s213 = sld [smem:[#allocation3 + %s24]]
      %s214 = smul.u32 %s213, 32
      %p215 = scmp.lt.s32.totalorder %s214, 256
      %s216 = scalar_select %p215, %s214, 256
      %v217 = vstv %s216
      %vm218 = vcmp.lt.s32.totalorder %v212, %v217
      %v219 = vsel %vm218, %v203, 0.0
      %v220 = vld [vmem:[%s194] sm:$0x1]
      %vm221 = vcmask 1041408
      %v222 = vsel %vm221, %v219, 0.0
      %v223 = vrot.slane %v222, 4
      %v224 = vadd.f32 %v222, %v223
      %v225 = vrot.slane %v224, 2
      %v226 = vadd.f32 %v224, %v225
      %v227 = vrot.slane %v226, 1
      %v228 = vadd.f32 %v226, %v227
      %v229 = vadd.f32 %v220, %v228
      %230 = vst [vmem:[%s194] sm:$0x1] %v229
      %p231 = scmp.lt.s32.totalorder %s24, 1
      %s232 = scalar_select %p231, %s24, 1
      %s233 = scalar_lea.vmem %s3, %s232
      // Predicated region
      $region33: #{mse_loss_masked.1} parent=27 // pred_check
        %p234 = pneg %p106
      $region34: #{mse_loss_masked.1} parent=27 // pred_check_branch
        %236 = sbr.rel (%p234) target = $region36
      $region35: #{mse_loss_masked.1} parent=27 // pred_region
        _
      $region36: #{mse_loss_masked.1} parent=27 // pred_fallthru
        _
    $region28: #{mse_loss_masked.1} parent=5 // pred_fallthru
      _
    %p237 = scmp.le.s32.totalorder 2, %s15
    // Predicated region
    $region37: #{mse_loss_masked.1} parent=5 // pred_check
      %p238 = pneg %p237
    $region38: #{mse_loss_masked.1} parent=5 // pred_check_branch
      %240 = sbr.rel (%p238) target = $region40
    $region39: #{mse_loss_masked.1} parent=5 // pred_region
      %s241 = ssub.s32 %s15, 2
      // Predicated region
      $region41: #{mse_loss_masked.1} parent=39 // pred_check
        %p242 = pneg %p112
      $region42: #{mse_loss_masked.1} parent=39 // pred_check_branch
        %244 = sbr.rel (%p242) target = $region44
      $region43: #{mse_loss_masked.1} parent=39 // pred_region
        %p245 = scmp.lt.s32.totalorder %s26, 1
        %s246 = scalar_select %p245, %s26, 1
        %s247 = scalar_lea.vmem %s3, %s246
      $region44: #{mse_loss_masked.1} parent=39 // pred_fallthru
        _
    $region40: #{mse_loss_masked.1} parent=5 // pred_fallthru
      _
  $region6: #{mse_loss_masked.1} parent=0 // loop_footer
    %s19 = sadd.s32 1, %s15
  $region7: #{mse_loss_masked.1} parent=0 // loop_footer_branch
    %14 = sbr.rel target = $region3
  $region8: #{mse_loss_masked.1} parent=0 // loop_exit
    _

</llo_original>
